<compile_context>
chip_gen: v6e
topology: v6e:2x2x1
jax: 0.10.0
libtpu: 0.0.40
codegen_flags: <defaults>
</compile_context>

<pallas_src>
import functools

import jax
import jax.numpy as jnp
from jax.experimental import pallas as pl
from jax.experimental.pallas import tpu as pltpu

LANE = 128


def _round_up(x, m):
    return (x + m - 1) // m * m


def _conv_stats_kernel(p_ref, w_ref, y_ref, sum_ref, sq_ref):
    """One (Cout, KC) x (KC, TS) MXU matmul + per-channel partial sum / sum-of-squares."""
    acc = jnp.dot(w_ref[...], p_ref[0],
                  preferred_element_type=jnp.float32)          # (Cout, TS) f32 accumulate
    y_ref[0] = acc
    sum_ref[0, 0] = acc.sum(axis=1, keepdims=True)             # (Cout, 1) partial sum
    sq_ref[0, 0] = (acc * acc).sum(axis=1, keepdims=True)      # (Cout, 1) partial sum-sq


def _bn_act_kernel(y_ref, scale_ref, shift_ref, o_ref, *, use_relu):
    """Pure per-channel fused multiply-add (+ optional ReLU); scale/shift precomputed."""
    o = y_ref[...] * scale_ref[...] + shift_ref[...]           # (1,Cout,TS) * (Cout,1)
    if use_relu:
        o = jnp.maximum(o, 0.0)
    o_ref[...] = o


def conv_block_forward(x_ncdhw, weight_oidhw, gamma, beta, *,
                       padding=1, eps=1e-5, activation="relu"):
    """Forward pass of ConvBlock. x: (N, Cin, D, H, W) NCDHW, weight: (Cout, Cin, k, k, k)."""
    N, Cin, D, H, W = x_ncdhw.shape
    Cout, Cin_w, kd, kh, kw = weight_oidhw.shape
    assert Cin_w == Cin and kd == kh == kw, "cubic kernel with matching Cin expected"
    K = kd
    p = int(padding)
    Do, Ho, Wo = D + 2 * p - K + 1, H + 2 * p - K + 1, W + 2 * p - K + 1
    assert Do > 0 and Ho > 0 and Wo > 0, "invalid padding/kernel combination"
    # TODO(synk): only stride=1 and padding_mode='zeros' are implemented here.

    x = x_ncdhw.astype(jnp.float32)
    xp = jnp.pad(x, ((0, 0), (0, 0), (p, p), (p, p), (p, p)))      # zero padding

    # im2col in the wrapper: fold all taps into the contraction dim once, ordered
    # (ci, kd, kh, kw) to match weight.reshape(Cout, Cin*K^3).
    # TODO(synk): for very large Cin, fold fewer taps / build patches per block in-kernel.
    taps = [xp[:, :, a:a + Do, b:b + Ho, c:c + Wo]
            for a in range(K) for b in range(K) for c in range(K)]
    KC = Cin * K * K * K
    S = Do * Ho * Wo
    pat = jnp.stack(taps, axis=2).reshape(N, KC, S)

    # Spatial tile: lane-dense (multiple of 128), sized for double-buffered VMEM on all gens.
    ts = min(2048, _round_up(S, LANE))
    budget = 8 * 1024 * 1024
    while ts > LANE and (KC * ts * 2 + Cout * ts * 4) * 2 > budget:
        ts = _round_up(ts // 2, LANE)
    S_pad = _round_up(S, ts)
    n_s = S_pad // ts

    pat = jnp.pad(pat, ((0, 0), (0, 0), (0, S_pad - S))).astype(jnp.bfloat16)
    wmat = weight_oidhw.reshape(Cout, KC).astype(jnp.bfloat16)

    cparams = pltpu.CompilerParams(
        dimension_semantics=("parallel", "parallel"),
        vmem_limit_bytes=32 * 1024 * 1024)

    y, psum, psq = pl.pallas_call(
        _conv_stats_kernel,
        out_shape=(
            jax.ShapeDtypeStruct((N, Cout, S_pad), jnp.float32),
            jax.ShapeDtypeStruct((N, n_s, Cout, 1), jnp.float32),
            jax.ShapeDtypeStruct((N, n_s, Cout, 1), jnp.float32),
        ),
        grid_spec=pltpu.PrefetchScalarGridSpec(
            num_scalar_prefetch=0,
            grid=(N, n_s),
            in_specs=[
                pl.BlockSpec((1, KC, ts), lambda n, s: (n, 0, s)),
                pl.BlockSpec((Cout, KC), lambda n, s: (0, 0)),
            ],
            out_specs=[
                pl.BlockSpec((1, Cout, ts), lambda n, s: (n, 0, s)),
                pl.BlockSpec((1, 1, Cout, 1), lambda n, s: (n, s, 0, 0)),
                pl.BlockSpec((1, 1, Cout, 1), lambda n, s: (n, s, 0, 0)),
            ],
        ),
        compiler_params=cparams,
    )(pat, wmat)

    # BatchNorm batch statistics (training mode, biased variance) from the per-tile
    # partial sums; scale/shift computed once on tiny (Cout,1) arrays (hoisted out of grid).
    # (Padded spatial columns are zero and contribute 0 to both sums; count uses real S.)
    # TODO(synk): for very large N*S switch to a shifted / two-pass variance to avoid
    # E[x^2]-E[x]^2 cancellation; running-stat (momentum) buffers are not materialized.
    count = jnp.float32(N * S)
    total = psum.sum(axis=(0, 1))                   # (Cout, 1)
    total_sq = psq.sum(axis=(0, 1))                 # (Cout, 1)
    mean = total / count
    var = jnp.maximum(total_sq / count - mean * mean, 0.0)
    g = gamma.reshape(Cout, 1).astype(jnp.float32)
    b = beta.reshape(Cout, 1).astype(jnp.float32)
    scale = g * jax.lax.rsqrt(var + eps)
    shift = b - mean * scale

    # TODO(synk): only ReLU / None activations are fused; other callables need their own epilogue.
    out = pl.pallas_call(
        functools.partial(_bn_act_kernel, use_relu=(activation == "relu")),
        out_shape=jax.ShapeDtypeStruct((N, Cout, S_pad), jnp.float32),
        grid_spec=pltpu.PrefetchScalarGridSpec(
            num_scalar_prefetch=0,
            grid=(N, n_s),
            in_specs=[
                pl.BlockSpec((1, Cout, ts), lambda n, s: (n, 0, s)),
                pl.BlockSpec((Cout, 1), lambda n, s: (0, 0)),
                pl.BlockSpec((Cout, 1), lambda n, s: (0, 0)),
            ],
            out_specs=pl.BlockSpec((1, Cout, ts), lambda n, s: (n, 0, s)),
        ),
        compiler_params=cparams,
        input_output_aliases={0: 0},   # BN+ReLU overwrites the conv buffer in place
    )(y, scale, shift)

    return out[:, :, :S].reshape(N, Cout, Do, Ho, Wo)


def _reference(x, weight, gamma, beta, eps=1e-5, use_relu=True):
    # Reference uses the same bf16 operand precision as the kernel's MXU matmul
    # (f32 accumulation), matching the documented precision choice.
    conv = jax.lax.conv_general_dilated(
        x.astype(jnp.bfloat16), weight.astype(jnp.bfloat16),
        window_strides=(1, 1, 1), padding=((1, 1), (1, 1), (1, 1)),
        dimension_numbers=("NCDHW", "OIDHW", "NCDHW"),
        preferred_element_type=jnp.float32)
    mean = conv.mean(axis=(0, 2, 3, 4), keepdims=True)
    var = conv.var(axis=(0, 2, 3, 4), keepdims=True)   # biased, as PyTorch BN normalization
    bn = (conv - mean) * jax.lax.rsqrt(var + eps)
    bn = bn * gamma.reshape(1, -1, 1, 1, 1) + beta.reshape(1, -1, 1, 1, 1)
    return jnp.maximum(bn, 0.0) if use_relu else bn


if __name__ == "__main__":
    key = jax.random.PRNGKey(0)
    kx, kw_, kg, kb = jax.random.split(key, 4)

    N, Cin, Cout, D, H, W, K = 2, 4, 8, 8, 8, 8, 3
    x = jax.random.normal(kx, (N, Cin, D, H, W), dtype=jnp.float32)       # NCDHW, like PyTorch

    fan_in = Cin * K * K * K
    weight = jax.random.normal(kw_, (Cout, Cin, K, K, K), jnp.float32) * (2.0 / fan_in) ** 0.5
    # PyTorch BN init is gamma=1, beta=0; perturb slightly to exercise the affine path.
    gamma = 1.0 + 0.1 * jax.random.normal(kg, (Cout,), jnp.float32)
    beta = 0.1 * jax.random.normal(kb, (Cout,), jnp.float32)

    fwd = jax.jit(functools.partial(conv_block_forward,
                                    padding=1, eps=1e-5, activation="relu"))
    out = jax.block_until_ready(fwd(x, weight, gamma, beta))

    ref = _reference(x, weight, gamma, beta, eps=1e-5, use_relu=True)
    assert out.shape == (N, Cout, D, H, W)
    max_err = float(jnp.abs(out - ref).max())
    assert jnp.allclose(out, ref, atol=2e-3, rtol=2e-3), max_err

    print("KERNEL_OK")
</pallas_src>

<mosaic_0001>
module attributes {stable_mosaic.version = 11 : i64} {
  func.func @_conv_stats_kernel(%arg0: i32, %arg1: i32, %arg2: memref<1x108x512xbf16, #tpu.memory_space<vmem>>, %arg3: memref<8x108xbf16, #tpu.memory_space<vmem>>, %arg4: memref<1x8x512xf32, #tpu.memory_space<vmem>>, %arg5: memref<1x1x8x1xf32, #tpu.memory_space<vmem>>, %arg6: memref<1x1x8x1xf32, #tpu.memory_space<vmem>>) attributes {dimension_semantics = [#tpu.dimension_semantics<parallel>, #tpu.dimension_semantics<parallel>], iteration_bounds = array<i64: 2, 1>, scalar_prefetch = 0 : i64, scratch_operands = 0 : i64, tpu.core_type = #tpu.core_type<tc>, window_params = [{transform_indices = @transform_0, window_bounds = array<i64: 1, 108, 512>}, {pipeline_mode = #tpu.pipeline_mode<synchronous>, transform_indices = @transform_1, window_bounds = array<i64: 8, 108>}, {transform_indices = @transform_2, window_bounds = array<i64: 1, 8, 512>}, {transform_indices = @transform_3, window_bounds = array<i64: 1, 1, 8, 1>}, {transform_indices = @transform_4, window_bounds = array<i64: 1, 1, 8, 1>}]} {
    %c0 = arith.constant 0 : index
    %c0_0 = arith.constant 0 : index
    %0 = vector.load %arg3[%c0, %c0_0] : memref<8x108xbf16, #tpu.memory_space<vmem>>, vector<8x108xbf16>
    %c0_1 = arith.constant 0 : index
    %c0_2 = arith.constant 0 : index
    %c0_3 = arith.constant 0 : index
    %1 = vector.load %arg2[%c0_1, %c0_2, %c0_3] : memref<1x108x512xbf16, #tpu.memory_space<vmem>>, vector<1x108x512xbf16>
    %2 = vector.shape_cast %1 : vector<1x108x512xbf16> to vector<108x512xbf16>
    %cst = arith.constant dense<0.000000e+00> : vector<8x512xf32>
    %3 = tpu.matmul %0, %2, %cst {dimension_numbers = #tpu.dot_dimension_numbers<[1], [0], [0], [1], [0, 0, 1, 1], [], []>} : vector<8x108xbf16>, vector<108x512xbf16>, vector<8x512xf32> -> vector<8x512xf32>
    %c0_4 = arith.constant 0 : index
    %c0_5 = arith.constant 0 : index
    %c0_6 = arith.constant 0 : index
    %4 = vector.load %arg4[%c0_4, %c0_5, %c0_6] : memref<1x8x512xf32, #tpu.memory_space<vmem>>, vector<1x8x512xf32>
    %5 = vector.shape_cast %4 : vector<1x8x512xf32> to vector<8x512xf32>
    %6 = vector.shape_cast %3 : vector<8x512xf32> to vector<1x8x512xf32>
    tpu.vector_store %arg4[%c0_4, %c0_5, %c0_6], %6 {strides = array<i32>} : memref<1x8x512xf32, #tpu.memory_space<vmem>>, vector<1x8x512xf32>,
    %cst_7 = arith.constant dense<0.000000e+00> : vector<8xf32>
    %7 = vector.multi_reduction <add>, %3, %cst_7 [1] : vector<8x512xf32> to vector<8xf32>
    %8 = vector.shape_cast %7 : vector<8xf32> to vector<8x1xf32>
    %c0_8 = arith.constant 0 : index
    %c0_9 = arith.constant 0 : index
    %c0_10 = arith.constant 0 : index
    %c0_11 = arith.constant 0 : index
    %9 = vector.load %arg5[%c0_8, %c0_9, %c0_10, %c0_11] : memref<1x1x8x1xf32, #tpu.memory_space<vmem>>, vector<1x1x8x1xf32>
    %10 = vector.shape_cast %9 : vector<1x1x8x1xf32> to vector<8x1xf32>
    %11 = vector.shape_cast %8 : vector<8x1xf32> to vector<1x1x8x1xf32>
    tpu.vector_store %arg5[%c0_8, %c0_9, %c0_10, %c0_11], %11 {strides = array<i32>} : memref<1x1x8x1xf32, #tpu.memory_space<vmem>>, vector<1x1x8x1xf32>,
    %12 = arith.mulf %3, %3 : vector<8x512xf32>
    %cst_12 = arith.constant dense<0.000000e+00> : vector<8xf32>
    %13 = vector.multi_reduction <add>, %12, %cst_12 [1] : vector<8x512xf32> to vector<8xf32>
    %14 = vector.shape_cast %13 : vector<8xf32> to vector<8x1xf32>
    %c0_13 = arith.constant 0 : index
    %c0_14 = arith.constant 0 : index
    %c0_15 = arith.constant 0 : index
    %c0_16 = arith.constant 0 : index
    %15 = vector.load %arg6[%c0_13, %c0_14, %c0_15, %c0_16] : memref<1x1x8x1xf32, #tpu.memory_space<vmem>>, vector<1x1x8x1xf32>
    %16 = vector.shape_cast %15 : vector<1x1x8x1xf32> to vector<8x1xf32>
    %17 = vector.shape_cast %14 : vector<8x1xf32> to vector<1x1x8x1xf32>
    tpu.vector_store %arg6[%c0_13, %c0_14, %c0_15, %c0_16], %17 {strides = array<i32>} : memref<1x1x8x1xf32, #tpu.memory_space<vmem>>, vector<1x1x8x1xf32>,
    return
  }
  func.func @transform_0(%arg0: i32, %arg1: i32) -> (i32, i32, i32) {
    %c0_i32 = arith.constant 0 : i32
    %c0_i32_0 = arith.constant 0 : i32
    return %arg0, %c0_i32, %arg1 : i32, i32, i32
  }
  func.func @transform_1(%arg0: i32, %arg1: i32) -> (i32, i32) {
    %c0_i32 = arith.constant 0 : i32
    %c0_i32_0 = arith.constant 0 : i32
    %c0_i32_1 = arith.constant 0 : i32
    return %c0_i32, %c0_i32_0 : i32, i32
  }
  func.func @transform_2(%arg0: i32, %arg1: i32) -> (i32, i32, i32) {
    %c0_i32 = arith.constant 0 : i32
    %c0_i32_0 = arith.constant 0 : i32
    return %arg0, %c0_i32, %arg1 : i32, i32, i32
  }
  func.func @transform_3(%arg0: i32, %arg1: i32) -> (i32, i32, i32, i32) {
    %c0_i32 = arith.constant 0 : i32
    %c0_i32_0 = arith.constant 0 : i32
    %c0_i32_1 = arith.constant 0 : i32
    return %arg0, %arg1, %c0_i32, %c0_i32_0 : i32, i32, i32, i32
  }
  func.func @transform_4(%arg0: i32, %arg1: i32) -> (i32, i32, i32, i32) {
    %c0_i32 = arith.constant 0 : i32
    %c0_i32_0 = arith.constant 0 : i32
    %c0_i32_1 = arith.constant 0 : i32
    return %arg0, %arg1, %c0_i32, %c0_i32_0 : i32, i32, i32, i32
  }
}

module attributes {stable_mosaic.version = 11 : i64} {
  func.func @_bn_act_kernel(%arg0: i32, %arg1: i32, %arg2: memref<1x8x512xf32, #tpu.memory_space<vmem>>, %arg3: memref<8x1xf32, #tpu.memory_space<vmem>>, %arg4: memref<8x1xf32, #tpu.memory_space<vmem>>, %arg5: memref<1x8x512xf32, #tpu.memory_space<vmem>>) attributes {dimension_semantics = [#tpu.dimension_semantics<parallel>, #tpu.dimension_semantics<parallel>], iteration_bounds = array<i64: 2, 1>, scalar_prefetch = 0 : i64, scratch_operands = 0 : i64, tpu.core_type = #tpu.core_type<tc>, window_params = [{transform_indices = @transform_0, window_bounds = array<i64: 1, 8, 512>}, {pipeline_mode = #tpu.pipeline_mode<synchronous>, transform_indices = @transform_1, window_bounds = array<i64: 8, 1>}, {pipeline_mode = #tpu.pipeline_mode<synchronous>, transform_indices = @transform_2, window_bounds = array<i64: 8, 1>}, {transform_indices = @transform_3, window_bounds = array<i64: 1, 8, 512>}]} {
    %c0 = arith.constant 0 : index
    %c0_0 = arith.constant 0 : index
    %c0_1 = arith.constant 0 : index
    %0 = vector.load %arg2[%c0, %c0_0, %c0_1] : memref<1x8x512xf32, #tpu.memory_space<vmem>>, vector<1x8x512xf32>
    %c0_2 = arith.constant 0 : index
    %c0_3 = arith.constant 0 : index
    %1 = vector.load %arg3[%c0_2, %c0_3] : memref<8x1xf32, #tpu.memory_space<vmem>>, vector<8x1xf32>
    %2 = vector.shape_cast %1 : vector<8x1xf32> to vector<1x8x1xf32>
    %3 = vector.broadcast %2 : vector<1x8x1xf32> to vector<1x8x512xf32>
    %4 = arith.mulf %0, %3 : vector<1x8x512xf32>
    %c0_4 = arith.constant 0 : index
    %c0_5 = arith.constant 0 : index
    %5 = vector.load %arg4[%c0_4, %c0_5] : memref<8x1xf32, #tpu.memory_space<vmem>>, vector<8x1xf32>
    %6 = vector.shape_cast %5 : vector<8x1xf32> to vector<1x8x1xf32>
    %7 = vector.broadcast %6 : vector<1x8x1xf32> to vector<1x8x512xf32>
    %8 = arith.addf %4, %7 : vector<1x8x512xf32>
    %cst = arith.constant 0.000000e+00 : f32
    %9 = vector.broadcast %cst : f32 to vector<1x8x512xf32>
    %10 = arith.maximumf %8, %9 : vector<1x8x512xf32>
    %c0_6 = arith.constant 0 : index
    %c0_7 = arith.constant 0 : index
    %c0_8 = arith.constant 0 : index
    %11 = vector.load %arg5[%c0_6, %c0_7, %c0_8] : memref<1x8x512xf32, #tpu.memory_space<vmem>>, vector<1x8x512xf32>
    tpu.vector_store %arg5[%c0_6, %c0_7, %c0_8], %10 {strides = array<i32>} : memref<1x8x512xf32, #tpu.memory_space<vmem>>, vector<1x8x512xf32>,
    return
  }
  func.func @transform_0(%arg0: i32, %arg1: i32) -> (i32, i32, i32) {
    %c0_i32 = arith.constant 0 : i32
    %c0_i32_0 = arith.constant 0 : i32
    return %arg0, %c0_i32, %arg1 : i32, i32, i32
  }
  func.func @transform_1(%arg0: i32, %arg1: i32) -> (i32, i32) {
    %c0_i32 = arith.constant 0 : i32
    %c0_i32_0 = arith.constant 0 : i32
    %c0_i32_1 = arith.constant 0 : i32
    return %c0_i32, %c0_i32_0 : i32, i32
  }
  func.func @transform_2(%arg0: i32, %arg1: i32) -> (i32, i32) {
    %c0_i32 = arith.constant 0 : i32
    %c0_i32_0 = arith.constant 0 : i32
    %c0_i32_1 = arith.constant 0 : i32
    return %c0_i32, %c0_i32_0 : i32, i32
  }
  func.func @transform_3(%arg0: i32, %arg1: i32) -> (i32, i32, i32) {
    %c0_i32 = arith.constant 0 : i32
    %c0_i32_0 = arith.constant 0 : i32
    return %arg0, %c0_i32, %arg1 : i32, i32, i32
  }
}

</mosaic_0001>

<llo_original>
// kernel: conv_block_forward.3
$region0: #{conv_block_forward.3}
  #allocation0 [shape = 'u32[]', space=smem, size = 0x4, offset = 0x4, fixed_abs, tag = 'smem constant byte address 0x4 - core index']
  #allocation1 [shape = 'u32[144,128]{1,0:T(1,128)}', space=vmem, size = 0x12000, scoped, tag = 'internal scratch']
  %s0 = inlined_call_operand.vmem [shape: f32[2,8,512], index: 0, kind: input, shape index: {}, may-alias: {0,3}]
  %s1 = inlined_call_operand.vmem [shape: f32[8,1], index: 1, kind: input, shape index: {}]
  %s2 = inlined_call_operand.vmem [shape: f32[8,1], index: 2, kind: input, shape index: {}]
  %s3 = inlined_call_operand.vmem [shape: f32[2,8,512], index: 3, kind: output, shape index: {}, may-alias: {0,3}]
  %s4 = sld [smem:[#allocation0]]
  $region45: #{conv_block_forward.3} parent=0
    _
  %s6 = ssub.s32 1, %s4
  %s7 = scalar_select 0, %s6, %s4
  loop: start=0, step=1, limit=4
  $region2: #{conv_block_forward.3} parent=0 // loop_pre_header
    _
  $region3: #{conv_block_forward.3} parent=0 // loop_header
    %s9 = sphi 0, %s13
    %p10 = scmp.ge.s32.totalorder %s9, 4
    %s16 = sphi 0, %s28
    %s17 = sphi 0, %s24
    %s18 = sphi 0, %s16
    %s19 = sphi 0, %s17
    %s20 = sphi 0, %s18
    %s21 = sphi 0, %s19
    %s33 = sphi 0, %s35
    %s36 = sphi 0, %s33
    %s37 = sphi 0, %s36
    %s53 = sphi 0, %s37
    %s57 = sphi 0, %s57
    %s59 = sphi 0, %s57
    %s60 = sphi 0, %s59
    %s74 = sphi 0, %s60
    %s78 = sphi 0, %s78
    %s80 = sphi 0, %s78
    %s81 = sphi 0, %s80
    %s95 = sphi 0, %s81
    %s103 = sphi 0, %s105
    %s106 = sphi 0, %s103
    %s107 = sphi 0, %s106
    %s123 = sphi 0, %s107
  $region4: #{conv_block_forward.3} parent=0 // loop_header_branch
    %12 = sbr.rel (%p10) target = $region8
  $region5: #{conv_block_forward.3} parent=0 // loop_body
    %s14 = ssub.s32 %s9, 1
    %s15 = ssub.s32 %s9, 2
    %s22 = sadd.s32 1, %s17
    %p23 = scmp.ge.s32.totalorder %s22, 1
    %s24 = scalar_select %p23, 0, %s22
    %s25 = sadd.s32 1, %s16
    %s26 = scalar_select %p23, %s25, %s16
    %p27 = scmp.ge.s32.totalorder %s26, 2
    %s28 = scalar_select %p27, 0, %s26
    %s29 = ssub.s32 %s16, %s28
    %s30 = ssub.s32 %s17, %s24
    %s31 = sor.u32 %s29, %s30
    %p32 = scmp.eq.s32.totalorder %s31, 0
    %s34 = sadd.s32 %s33, 1
    %s35 = scalar_select %p32, %s33, %s34
    %p38 = pneg %p32
    %p39 = scmp.eq.s32.totalorder %s9, 1
    %p40 = por %p38, %p39
    %p41 = scmp.ne.s32.totalorder %s33, %s36
    %p42 = scmp.eq.s32.totalorder %s9, 0
    %p43 = por %p41, %p42
    %p44 = scmp.ne.s32.totalorder %s33, %s36
    %p45 = scmp.eq.s32.totalorder %s14, 1
    %p46 = por %p44, %p45
    %p47 = scmp.ne.s32.totalorder %s36, %s37
    %p48 = scmp.eq.s32.totalorder %s14, 0
    %p49 = por %p47, %p48
    %p50 = scmp.ne.s32.totalorder %s36, %s37
    %p51 = scmp.eq.s32.totalorder %s15, 1
    %p52 = por %p50, %p51
    %p54 = scmp.ne.s32.totalorder %s37, %s53
    %p55 = scmp.eq.s32.totalorder %s15, 0
    %p56 = por %p54, %p55
    %s58 = sadd.s32 %s57, 1
    %p61 = scmp.eq.s32.totalorder %s9, 1
    %p62 = scmp.ne.s32.totalorder %s57, %s59
    %p63 = scmp.eq.s32.totalorder %s9, 0
    %p64 = por %p62, %p63
    %p65 = scmp.ne.s32.totalorder %s57, %s59
    %p66 = scmp.eq.s32.totalorder %s14, 1
    %p67 = por %p65, %p66
    %p68 = scmp.ne.s32.totalorder %s59, %s60
    %p69 = scmp.eq.s32.totalorder %s14, 0
    %p70 = por %p68, %p69
    %p71 = scmp.ne.s32.totalorder %s59, %s60
    %p72 = scmp.eq.s32.totalorder %s15, 1
    %p73 = por %p71, %p72
    %p75 = scmp.ne.s32.totalorder %s60, %s74
    %p76 = scmp.eq.s32.totalorder %s15, 0
    %p77 = por %p75, %p76
    %s79 = sadd.s32 %s78, 1
    %p82 = scmp.eq.s32.totalorder %s9, 1
    %p83 = scmp.ne.s32.totalorder %s78, %s80
    %p84 = scmp.eq.s32.totalorder %s9, 0
    %p85 = por %p83, %p84
    %p86 = scmp.ne.s32.totalorder %s78, %s80
    %p87 = scmp.eq.s32.totalorder %s14, 1
    %p88 = por %p86, %p87
    %p89 = scmp.ne.s32.totalorder %s80, %s81
    %p90 = scmp.eq.s32.totalorder %s14, 0
    %p91 = por %p89, %p90
    %p92 = scmp.ne.s32.totalorder %s80, %s81
    %p93 = scmp.eq.s32.totalorder %s15, 1
    %p94 = por %p92, %p93
    %p96 = scmp.ne.s32.totalorder %s81, %s95
    %p97 = scmp.eq.s32.totalorder %s15, 0
    %p98 = por %p96, %p97
    %s99 = ssub.s32 %s16, %s28
    %s100 = ssub.s32 %s17, %s24
    %s101 = sor.u32 %s99, %s100
    %p102 = scmp.eq.s32.totalorder %s101, 0
    %s104 = sadd.s32 %s103, 1
    %s105 = scalar_select %p102, %s103, %s104
    %p108 = pneg %p102
    %p109 = scmp.eq.s32.totalorder %s9, 1
    %p110 = por %p108, %p109
    %p111 = scmp.ne.s32.totalorder %s103, %s106
    %p112 = scmp.eq.s32.totalorder %s9, 0
    %p113 = por %p111, %p112
    %p114 = scmp.ne.s32.totalorder %s103, %s106
    %p115 = scmp.eq.s32.totalorder %s14, 1
    %p116 = por %p114, %p115
    %p117 = scmp.ne.s32.totalorder %s106, %s107
    %p118 = scmp.eq.s32.totalorder %s14, 0
    %p119 = por %p117, %p118
    %p120 = scmp.ne.s32.totalorder %s106, %s107
    %p121 = scmp.eq.s32.totalorder %s15, 1
    %p122 = por %p120, %p121
    %p124 = scmp.ne.s32.totalorder %s107, %s123
    %p125 = scmp.eq.s32.totalorder %s15, 0
    %p126 = por %p124, %p125
    %p127 = scmp.le.s32.totalorder 1, %s9
    %p128 = scmp.lt.s32.totalorder %s9, 3
    %p129 = pnand %p127, %p128
    %p130 = pneg %p129
    // Predicated region
    $region9: #{conv_block_forward.3} parent=5 // pred_check
      _
    $region10: #{conv_block_forward.3} parent=5 // pred_check_branch
      %132 = sbr.rel (%p129) target = $region12
    $region11: #{conv_block_forward.3} parent=5 // pred_region
      %s133 = ssub.s32 %s9, 1
      // Predicated region
      $region13: #{conv_block_forward.3} parent=11 // pred_check
        %p134 = pneg %p70
      $region14: #{conv_block_forward.3} parent=11 // pred_check_branch
        %136 = sbr.rel (%p134) target = $region16
      $region15: #{conv_block_forward.3} parent=11 // pred_region
        _
      $region16: #{conv_block_forward.3} parent=11 // pred_fallthru
        _
      // Predicated region
      $region17: #{conv_block_forward.3} parent=11 // pred_check
        %p137 = pneg %p91
      $region18: #{conv_block_forward.3} parent=11 // pred_check_branch
        %139 = sbr.rel (%p137) target = $region20
      $region19: #{conv_block_forward.3} parent=11 // pred_region
        _
      $region20: #{conv_block_forward.3} parent=11 // pred_fallthru
        _
    $region12: #{conv_block_forward.3} parent=5 // pred_fallthru
      _
    %p140 = scmp.lt.s32.totalorder %s9, 2
    // Predicated region
    $region21: #{conv_block_forward.3} parent=5 // pred_check
      %p141 = pneg %p140
    $region22: #{conv_block_forward.3} parent=5 // pred_check_branch
      %143 = sbr.rel (%p141) target = $region24
    $region23: #{conv_block_forward.3} parent=5 // pred_region
      // Predicated region
      $region25: #{conv_block_forward.3} parent=23 // pred_check
        %p144 = pneg %p43
      $region26: #{conv_block_forward.3} parent=23 // pred_check_branch
        %146 = sbr.rel (%p144) target = $region28
      $region27: #{conv_block_forward.3} parent=23 // pred_region
        %s147 = smul.u32 4, %s17
        %p148 = scmp.lt.s32.totalorder %s16, 1
        %s149 = scalar_select %p148, %s16, 1
        %p150 = scmp.lt.s32.totalorder %s147, 3
        %s151 = scalar_select %p150, %s147, 3
        %s152 = smul.addr %s149, 4
        %s153 = sadd.s32 %s151, %s152
        %s154 = smul.addr %s153, 8
        %s155 = scalar_lea.vmem %s0, %s154
        %s156 = smul.u32 4, %s17
      $region28: #{conv_block_forward.3} parent=23 // pred_fallthru
        _
    $region24: #{conv_block_forward.3} parent=5 // pred_fallthru
      _
    %p157 = scmp.le.s32.totalorder 1, %s9
    %p158 = scmp.lt.s32.totalorder %s9, 3
    %p159 = pnand %p157, %p158
    %p160 = pneg %p159
    // Predicated region
    $region29: #{conv_block_forward.3} parent=5 // pred_check
      _
    $region30: #{conv_block_forward.3} parent=5 // pred_check_branch
      %162 = sbr.rel (%p159) target = $region32
    $region31: #{conv_block_forward.3} parent=5 // pred_region
      %s163 = ssub.s32 %s9, 1
      %s164 = smul.u32 4, %s19
      %p165 = scmp.lt.s32.totalorder %s18, 1
      %s166 = scalar_select %p165, %s18, 1
      %p167 = scmp.lt.s32.totalorder %s164, 3
      %s168 = scalar_select %p167, %s164, 3
      %s169 = smul.addr %s166, 4
      %s170 = sadd.s32 %s168, %s169
      %s171 = smul.addr %s170, 8
      %s172 = scalar_lea.vmem %s0, %s171
      %p173 = pneg %p49
      %p174 = pneg %p46
      %p175 = pneg %p70
      %p176 = pneg %p67
      %p177 = pneg %p91
      %p178 = pneg %p88
      %p179 = pneg %p119
      %p180 = pneg %p116
      %s181 = smul.u32 4, %s19
      %p182 = scmp.lt.s32.totalorder %s18, 1
      %s183 = scalar_select %p182, %s18, 1
      %p184 = scmp.lt.s32.totalorder %s181, 3
      %s185 = scalar_select %p184, %s181, 3
      %s186 = smul.addr %s183, 4
      %s187 = sadd.s32 %s185, %s186
      %s188 = smul.addr %s187, 8
      %s189 = scalar_lea.vmem %s3, %s188
      %s190 = smul.u32 4, %s19
      %p191 = scmp.lt.s32.totalorder %s18, 1
      %s192 = scalar_select %p191, %s18, 1
      %p193 = scmp.lt.s32.totalorder %s190, 3
      %s194 = scalar_select %p193, %s190, 3
      %s195 = smul.addr %s192, 4
      %s196 = sadd.s32 %s194, %s195
      %s197 = smul.addr %s196, 8
      %s198 = scalar_lea.vmem %s0, %s197
      %s199 = smul.u32 4, %s19
      %s200 = smul.u32 4, %s19
      %p201 = scmp.lt.s32.totalorder %s18, 1
      %s202 = scalar_select %p201, %s18, 1
      %p203 = scmp.lt.s32.totalorder %s200, 3
      %s204 = scalar_select %p203, %s200, 3
      %s205 = smul.addr %s202, 4
      %s206 = sadd.s32 %s204, %s205
      %s207 = smul.addr %s206, 8
      %s208 = scalar_lea.vmem %s3, %s207
      %s209 = smul.u32 4, %s19
      %v210 = vld [vmem:[%s198] sm:$0xff]
      %v211 = vld [vmem:[%s198 + $0x8] sm:$0xff]
      %v212 = vld [vmem:[%s198 + $0x10] sm:$0xff]
      %v213 = vld [vmem:[%s198 + $0x18] sm:$0xff]
      %v214 = vld [vmem:[%s1] sm:$0xff]
      %216 = vset.pattern.permute.xlu0 0
      %217 = vperm.xlu0 %216, %v214
      %v218 = vpop.permute.xlu0 %217
      %v220 = vmul.f32 %v210, %v218
      %v221 = vmul.f32 %v211, %v218
      %v222 = vmul.f32 %v212, %v218
      %v223 = vmul.f32 %v213, %v218
      %v224 = vld [vmem:[%s2] sm:$0xff]
      %226 = vset.pattern.permute.xlu0 0
      %227 = vperm.xlu0 %226, %v224
      %v228 = vpop.permute.xlu0 %227
      %v230 = vadd.f32 %v220, %v228
      %v231 = vadd.f32 %v221, %v228
      %v232 = vadd.f32 %v222, %v228
      %v233 = vadd.f32 %v223, %v228
      %v234 = vmax.f32 %v230, 0.0
      %v235 = vmax.f32 %v231, 0.0
      %v236 = vmax.f32 %v232, 0.0
      %v237 = vmax.f32 %v233, 0.0
      %238 = vst [vmem:[%s208] sm:$0xff] %v234
      %239 = vst [vmem:[%s208 + $0x8] sm:$0xff] %v235
      %240 = vst [vmem:[%s208 + $0x10] sm:$0xff] %v236
      %241 = vst [vmem:[%s208 + $0x18] sm:$0xff] %v237
      %s242 = smul.u32 4, %s19
      %p243 = scmp.lt.s32.totalorder %s18, 1
      %s244 = scalar_select %p243, %s18, 1
      %p245 = scmp.lt.s32.totalorder %s242, 3
      %s246 = scalar_select %p245, %s242, 3
      %s247 = smul.addr %s244, 4
      %s248 = sadd.s32 %s246, %s247
      %s249 = smul.addr %s248, 8
      %s250 = scalar_lea.vmem %s3, %s249
      // Predicated region
      $region33: #{conv_block_forward.3} parent=31 // pred_check
        %p251 = pneg %p116
      $region34: #{conv_block_forward.3} parent=31 // pred_check_branch
        %253 = sbr.rel (%p251) target = $region36
      $region35: #{conv_block_forward.3} parent=31 // pred_region
        %s254 = smul.u32 4, %s19
      $region36: #{conv_block_forward.3} parent=31 // pred_fallthru
        _
    $region32: #{conv_block_forward.3} parent=5 // pred_fallthru
      _
    %p255 = scmp.le.s32.totalorder 2, %s9
    // Predicated region
    $region37: #{conv_block_forward.3} parent=5 // pred_check
      %p256 = pneg %p255
    $region38: #{conv_block_forward.3} parent=5 // pred_check_branch
      %258 = sbr.rel (%p256) target = $region40
    $region39: #{conv_block_forward.3} parent=5 // pred_region
      %s259 = ssub.s32 %s9, 2
      // Predicated region
      $region41: #{conv_block_forward.3} parent=39 // pred_check
        %p260 = pneg %p122
      $region42: #{conv_block_forward.3} parent=39 // pred_check_branch
        %262 = sbr.rel (%p260) target = $region44
      $region43: #{conv_block_forward.3} parent=39 // pred_region
        %s263 = smul.u32 4, %s21
        %p264 = scmp.lt.s32.totalorder %s20, 1
        %s265 = scalar_select %p264, %s20, 1
        %p266 = scmp.lt.s32.totalorder %s263, 3
        %s267 = scalar_select %p266, %s263, 3
        %s268 = smul.addr %s265, 4
        %s269 = sadd.s32 %s267, %s268
        %s270 = smul.addr %s269, 8
        %s271 = scalar_lea.vmem %s3, %s270
      $region44: #{conv_block_forward.3} parent=39 // pred_fallthru
        _
    $region40: #{conv_block_forward.3} parent=5 // pred_fallthru
      _
  $region6: #{conv_block_forward.3} parent=0 // loop_footer
    %s13 = sadd.s32 1, %s9
  $region7: #{conv_block_forward.3} parent=0 // loop_footer_branch
    %8 = sbr.rel target = $region3
  $region8: #{conv_block_forward.3} parent=0 // loop_exit
    _

// kernel: conv_block_forward.2
$region0: #{conv_block_forward.2}
  #allocation0 [shape = 'u32[]', space=smem, size = 0x4, offset = 0x4, fixed_abs, tag = 'smem constant byte address 0x4 - core index']
  #allocation1 [shape = 'u32[144,128]{1,0:T(1,128)}', space=vmem, size = 0x12000, scoped, tag = 'internal scratch']
  %s0 = inlined_call_operand.vmem [shape: bf16[2,108,512], index: 0, kind: input, shape index: {}]
  %s1 = inlined_call_operand.vmem [shape: bf16[8,108], index: 1, kind: input, shape index: {}]
  %s2 = inlined_call_operand.vmem [shape: f32[2,8,512], index: 2, kind: output, shape index: {0}]
  %s3 = inlined_call_operand.vmem [shape: f32[2,1,8,1], index: 3, kind: output, shape index: {1}]
  %s4 = inlined_call_operand.vmem [shape: f32[2,1,8,1], index: 4, kind: output, shape index: {2}]
  %5 = xla_tuple %s2, %s3, %s4
  %s6 = sld [smem:[#allocation0]]
  $region57: #{conv_block_forward.2} parent=0
    _
  %s8 = ssub.s32 1, %s6
  %s9 = scalar_select 0, %s8, %s6
  loop: start=0, step=1, limit=4
  $region2: #{conv_block_forward.2} parent=0 // loop_pre_header
    _
  $region3: #{conv_block_forward.2} parent=0 // loop_header
    %s11 = sphi 0, %s15
    %p12 = scmp.ge.s32.totalorder %s11, 4
    %s18 = sphi 0, %s30
    %s19 = sphi 0, %s26
    %s20 = sphi 0, %s18
    %s21 = sphi 0, %s19
    %s22 = sphi 0, %s20
    %s23 = sphi 0, %s21
    %s35 = sphi 0, %s37
    %s38 = sphi 0, %s35
    %s39 = sphi 0, %s38
    %s55 = sphi 0, %s39
    %s59 = sphi 0, %s59
    %s61 = sphi 0, %s59
    %s62 = sphi 0, %s61
    %s76 = sphi 0, %s62
    %s84 = sphi 0, %s86
    %s87 = sphi 0, %s84
    %s88 = sphi 0, %s87
    %s104 = sphi 0, %s88
    %s112 = sphi 0, %s114
    %s115 = sphi 0, %s112
    %s116 = sphi 0, %s115
    %s132 = sphi 0, %s116
    %s140 = sphi 0, %s142
    %s143 = sphi 0, %s140
    %s144 = sphi 0, %s143
    %s160 = sphi 0, %s144
  $region4: #{conv_block_forward.2} parent=0 // loop_header_branch
    %14 = sbr.rel (%p12) target = $region8
  $region5: #{conv_block_forward.2} parent=0 // loop_body
    %s16 = ssub.s32 %s11, 1
    %s17 = ssub.s32 %s11, 2
    %s24 = sadd.s32 1, %s19
    %p25 = scmp.ge.s32.totalorder %s24, 1
    %s26 = scalar_select %p25, 0, %s24
    %s27 = sadd.s32 1, %s18
    %s28 = scalar_select %p25, %s27, %s18
    %p29 = scmp.ge.s32.totalorder %s28, 2
    %s30 = scalar_select %p29, 0, %s28
    %s31 = ssub.s32 %s18, %s30
    %s32 = ssub.s32 %s19, %s26
    %s33 = sor.u32 %s31, %s32
    %p34 = scmp.eq.s32.totalorder %s33, 0
    %s36 = sadd.s32 %s35, 1
    %s37 = scalar_select %p34, %s35, %s36
    %p40 = pneg %p34
    %p41 = scmp.eq.s32.totalorder %s11, 1
    %p42 = por %p40, %p41
    %p43 = scmp.ne.s32.totalorder %s35, %s38
    %p44 = scmp.eq.s32.totalorder %s11, 0
    %p45 = por %p43, %p44
    %p46 = scmp.ne.s32.totalorder %s35, %s38
    %p47 = scmp.eq.s32.totalorder %s16, 1
    %p48 = por %p46, %p47
    %p49 = scmp.ne.s32.totalorder %s38, %s39
    %p50 = scmp.eq.s32.totalorder %s16, 0
    %p51 = por %p49, %p50
    %p52 = scmp.ne.s32.totalorder %s38, %s39
    %p53 = scmp.eq.s32.totalorder %s17, 1
    %p54 = por %p52, %p53
    %p56 = scmp.ne.s32.totalorder %s39, %s55
    %p57 = scmp.eq.s32.totalorder %s17, 0
    %p58 = por %p56, %p57
    %s60 = sadd.s32 %s59, 1
    %p63 = scmp.eq.s32.totalorder %s11, 1
    %p64 = scmp.ne.s32.totalorder %s59, %s61
    %p65 = scmp.eq.s32.totalorder %s11, 0
    %p66 = por %p64, %p65
    %p67 = scmp.ne.s32.totalorder %s59, %s61
    %p68 = scmp.eq.s32.totalorder %s16, 1
    %p69 = por %p67, %p68
    %p70 = scmp.ne.s32.totalorder %s61, %s62
    %p71 = scmp.eq.s32.totalorder %s16, 0
    %p72 = por %p70, %p71
    %p73 = scmp.ne.s32.totalorder %s61, %s62
    %p74 = scmp.eq.s32.totalorder %s17, 1
    %p75 = por %p73, %p74
    %p77 = scmp.ne.s32.totalorder %s62, %s76
    %p78 = scmp.eq.s32.totalorder %s17, 0
    %p79 = por %p77, %p78
    %s80 = ssub.s32 %s18, %s30
    %s81 = ssub.s32 %s19, %s26
    %s82 = sor.u32 %s80, %s81
    %p83 = scmp.eq.s32.totalorder %s82, 0
    %s85 = sadd.s32 %s84, 1
    %s86 = scalar_select %p83, %s84, %s85
    %p89 = pneg %p83
    %p90 = scmp.eq.s32.totalorder %s11, 1
    %p91 = por %p89, %p90
    %p92 = scmp.ne.s32.totalorder %s84, %s87
    %p93 = scmp.eq.s32.totalorder %s11, 0
    %p94 = por %p92, %p93
    %p95 = scmp.ne.s32.totalorder %s84, %s87
    %p96 = scmp.eq.s32.totalorder %s16, 1
    %p97 = por %p95, %p96
    %p98 = scmp.ne.s32.totalorder %s87, %s88
    %p99 = scmp.eq.s32.totalorder %s16, 0
    %p100 = por %p98, %p99
    %p101 = scmp.ne.s32.totalorder %s87, %s88
    %p102 = scmp.eq.s32.totalorder %s17, 1
    %p103 = por %p101, %p102
    %p105 = scmp.ne.s32.totalorder %s88, %s104
    %p106 = scmp.eq.s32.totalorder %s17, 0
    %p107 = por %p105, %p106
    %s108 = ssub.s32 %s18, %s30
    %s109 = ssub.s32 %s19, %s26
    %s110 = sor.u32 %s108, %s109
    %p111 = scmp.eq.s32.totalorder %s110, 0
    %s113 = sadd.s32 %s112, 1
    %s114 = scalar_select %p111, %s112, %s113
    %p117 = pneg %p111
    %p118 = scmp.eq.s32.totalorder %s11, 1
    %p119 = por %p117, %p118
    %p120 = scmp.ne.s32.totalorder %s112, %s115
    %p121 = scmp.eq.s32.totalorder %s11, 0
    %p122 = por %p120, %p121
    %p123 = scmp.ne.s32.totalorder %s112, %s115
    %p124 = scmp.eq.s32.totalorder %s16, 1
    %p125 = por %p123, %p124
    %p126 = scmp.ne.s32.totalorder %s115, %s116
    %p127 = scmp.eq.s32.totalorder %s16, 0
    %p128 = por %p126, %p127
    %p129 = scmp.ne.s32.totalorder %s115, %s116
    %p130 = scmp.eq.s32.totalorder %s17, 1
    %p131 = por %p129, %p130
    %p133 = scmp.ne.s32.totalorder %s116, %s132
    %p134 = scmp.eq.s32.totalorder %s17, 0
    %p135 = por %p133, %p134
    %s136 = ssub.s32 %s18, %s30
    %s137 = ssub.s32 %s19, %s26
    %s138 = sor.u32 %s136, %s137
    %p139 = scmp.eq.s32.totalorder %s138, 0
    %s141 = sadd.s32 %s140, 1
    %s142 = scalar_select %p139, %s140, %s141
    %p145 = pneg %p139
    %p146 = scmp.eq.s32.totalorder %s11, 1
    %p147 = por %p145, %p146
    %p148 = scmp.ne.s32.totalorder %s140, %s143
    %p149 = scmp.eq.s32.totalorder %s11, 0
    %p150 = por %p148, %p149
    %p151 = scmp.ne.s32.totalorder %s140, %s143
    %p152 = scmp.eq.s32.totalorder %s16, 1
    %p153 = por %p151, %p152
    %p154 = scmp.ne.s32.totalorder %s143, %s144
    %p155 = scmp.eq.s32.totalorder %s16, 0
    %p156 = por %p154, %p155
    %p157 = scmp.ne.s32.totalorder %s143, %s144
    %p158 = scmp.eq.s32.totalorder %s17, 1
    %p159 = por %p157, %p158
    %p161 = scmp.ne.s32.totalorder %s144, %s160
    %p162 = scmp.eq.s32.totalorder %s17, 0
    %p163 = por %p161, %p162
    %p164 = scmp.le.s32.totalorder 1, %s11
    %p165 = scmp.lt.s32.totalorder %s11, 3
    %p166 = pnand %p164, %p165
    %p167 = pneg %p166
    // Predicated region
    $region9: #{conv_block_forward.2} parent=5 // pred_check
      _
    $region10: #{conv_block_forward.2} parent=5 // pred_check_branch
      %169 = sbr.rel (%p166) target = $region12
    $region11: #{conv_block_forward.2} parent=5 // pred_region
      %s170 = ssub.s32 %s11, 1
      // Predicated region
      $region13: #{conv_block_forward.2} parent=11 // pred_check
        %p171 = pneg %p72
      $region14: #{conv_block_forward.2} parent=11 // pred_check_branch
        %173 = sbr.rel (%p171) target = $region16
      $region15: #{conv_block_forward.2} parent=11 // pred_region
        _
      $region16: #{conv_block_forward.2} parent=11 // pred_fallthru
        _
    $region12: #{conv_block_forward.2} parent=5 // pred_fallthru
      _
    %p174 = scmp.lt.s32.totalorder %s11, 2
    // Predicated region
    $region17: #{conv_block_forward.2} parent=5 // pred_check
      %p175 = pneg %p174
    $region18: #{conv_block_forward.2} parent=5 // pred_check_branch
      %177 = sbr.rel (%p175) target = $region20
    $region19: #{conv_block_forward.2} parent=5 // pred_region
      // Predicated region
      $region21: #{conv_block_forward.2} parent=19 // pred_check
        %p178 = pneg %p45
      $region22: #{conv_block_forward.2} parent=19 // pred_check_branch
        %180 = sbr.rel (%p178) target = $region24
      $region23: #{conv_block_forward.2} parent=19 // pred_region
        %s181 = smul.u32 4, %s19
        %p182 = scmp.lt.s32.totalorder %s18, 1
        %s183 = scalar_select %p182, %s18, 1
        %p184 = scmp.lt.s32.totalorder %s181, 3
        %s185 = scalar_select %p184, %s181, 3
        %s186 = smul.addr %s183, 56
        %s187 = sadd.s32 %s185, %s186
        %s188 = smul.addr %s187, 4
        %s189 = scalar_lea.vmem %s0, %s188
        %s190 = smul.u32 4, %s19
      $region24: #{conv_block_forward.2} parent=19 // pred_fallthru
        _
    $region20: #{conv_block_forward.2} parent=5 // pred_fallthru
      _
    %p191 = scmp.le.s32.totalorder 1, %s11
    %p192 = scmp.lt.s32.totalorder %s11, 3
    %p193 = pnand %p191, %p192
    %p194 = pneg %p193
    // Predicated region
    $region25: #{conv_block_forward.2} parent=5 // pred_check
      _
    $region26: #{conv_block_forward.2} parent=5 // pred_check_branch
      %196 = sbr.rel (%p193) target = $region28
    $region27: #{conv_block_forward.2} parent=5 // pred_region
      %s197 = ssub.s32 %s11, 1
      %s198 = smul.u32 4, %s21
      %p199 = scmp.lt.s32.totalorder %s20, 1
      %s200 = scalar_select %p199, %s20, 1
      %p201 = scmp.lt.s32.totalorder %s198, 3
      %s202 = scalar_select %p201, %s198, 3
      %s203 = smul.addr %s200, 56
      %s204 = sadd.s32 %s202, %s203
      %s205 = smul.addr %s204, 4
      %s206 = scalar_lea.vmem %s0, %s205
      %p207 = pneg %p51
      %p208 = pneg %p48
      %p209 = pneg %p72
      %p210 = pneg %p69
      %p211 = pneg %p100
      %p212 = pneg %p97
      %s213 = smul.u32 4, %s21
      %p214 = scmp.lt.s32.totalorder %s20, 1
      %s215 = scalar_select %p214, %s20, 1
      %p216 = scmp.lt.s32.totalorder %s213, 3
      %s217 = scalar_select %p216, %s213, 3
      %s218 = smul.addr %s215, 4
      %s219 = sadd.s32 %s217, %s218
      %s220 = smul.addr %s219, 8
      %s221 = scalar_lea.vmem %s2, %s220
      %p222 = pneg %p128
      %p223 = pneg %p125
      %p224 = scmp.lt.s32.totalorder %s20, 1
      %s225 = scalar_select %p224, %s20, 1
      %p226 = scmp.lt.s32.totalorder %s21, 0
      %s227 = scalar_select %p226, %s21, 0
      %s228 = sadd.s32 %s227, %s225
      %s229 = smul.addr %s228, 8
      %s230 = scalar_lea.vmem %s3, %s229
      %p231 = pneg %p156
      %p232 = pneg %p153
      %p233 = scmp.lt.s32.totalorder %s20, 1
      %s234 = scalar_select %p233, %s20, 1
      %p235 = scmp.lt.s32.totalorder %s21, 0
      %s236 = scalar_select %p235, %s21, 0
      %s237 = sadd.s32 %s236, %s234
      %s238 = smul.addr %s237, 8
      %s239 = scalar_lea.vmem %s4, %s238
      %s240 = smul.u32 4, %s21
      %p241 = scmp.lt.s32.totalorder %s20, 1
      %s242 = scalar_select %p241, %s20, 1
      %p243 = scmp.lt.s32.totalorder %s240, 3
      %s244 = scalar_select %p243, %s240, 3
      %s245 = smul.addr %s242, 56
      %s246 = sadd.s32 %s244, %s245
      %s247 = smul.addr %s246, 4
      %s248 = scalar_lea.vmem %s0, %s247
      %s249 = smul.u32 4, %s21
      %s250 = smul.u32 4, %s21
      %p251 = scmp.lt.s32.totalorder %s20, 1
      %s252 = scalar_select %p251, %s20, 1
      %p253 = scmp.lt.s32.totalorder %s250, 3
      %s254 = scalar_select %p253, %s250, 3
      %s255 = smul.addr %s252, 4
      %s256 = sadd.s32 %s254, %s255
      %s257 = smul.addr %s256, 8
      %s258 = scalar_lea.vmem %s2, %s257
      %s259 = smul.u32 4, %s21
      %p260 = scmp.lt.s32.totalorder %s20, 1
      %s261 = scalar_select %p260, %s20, 1
      %p262 = scmp.lt.s32.totalorder %s21, 0
      %s263 = scalar_select %p262, %s21, 0
      %s264 = sadd.s32 %s263, %s261
      %s265 = smul.addr %s264, 8
      %s266 = scalar_lea.vmem %s3, %s265
      %p267 = scmp.lt.s32.totalorder %s20, 1
      %s268 = scalar_select %p267, %s20, 1
      %p269 = scmp.lt.s32.totalorder %s21, 0
      %s270 = scalar_select %p269, %s21, 0
      %s271 = sadd.s32 %s270, %s268
      %s272 = smul.addr %s271, 8
      %s273 = scalar_lea.vmem %s4, %s272
      %v275 = vld [vmem:[%s1] sm:$0xf]
      %v276 = vld [vmem:[%s248] sm:$0xff]
      %v277 = vld [vmem:[%s248 + $0x8] sm:$0xff]
      %v278 = vld [vmem:[%s248 + $0x10] sm:$0xff]
      %v279 = vld [vmem:[%s248 + $0x18] sm:$0xff]
      %v280 = vld [vmem:[%s248 + $0x20] sm:$0xff]
      %v281 = vld [vmem:[%s248 + $0x28] sm:$0xff]
      %v282 = vld [vmem:[%s248 + $0x30] sm:$0xff]
      %v283 = vld [vmem:[%s248 + $0x38] sm:$0xff]
      %v284 = vld [vmem:[%s248 + $0x40] sm:$0xff]
      %v285 = vld [vmem:[%s248 + $0x48] sm:$0xff]
      %v286 = vld [vmem:[%s248 + $0x50] sm:$0xff]
      %v287 = vld [vmem:[%s248 + $0x58] sm:$0xff]
      %v288 = vld [vmem:[%s248 + $0x60] sm:$0xff]
      %v289 = vld [vmem:[%s248 + $0x68] sm:$0xff]
      %v290 = vld [vmem:[%s248 + $0x70] sm:$0xff]
      %v291 = vld [vmem:[%s248 + $0x78] sm:$0xff]
      %v292 = vld [vmem:[%s248 + $0x80] sm:$0xff]
      %v293 = vld [vmem:[%s248 + $0x88] sm:$0xff]
      %v294 = vld [vmem:[%s248 + $0x90] sm:$0xff]
      %v295 = vld [vmem:[%s248 + $0x98] sm:$0xff]
      %v296 = vld [vmem:[%s248 + $0xa0] sm:$0xff]
      %v297 = vld [vmem:[%s248 + $0xa8] sm:$0xff]
      %v298 = vld [vmem:[%s248 + $0xb0] sm:$0xff]
      %v299 = vld [vmem:[%s248 + $0xb8] sm:$0xff]
      %v300 = vld [vmem:[%s248 + $0xc0] sm:$0xff]
      %v301 = vld [vmem:[%s248 + $0xc8] sm:$0xff]
      %v302 = vld [vmem:[%s248 + $0xd0] sm:$0x33]
      %v303 = vld [vmem:[%s248 + $0xd8] sm:$0x33]
      %v332 = vunpack.c.l.b16 %v276
      %v333 = vunpack.c.h.b16 %v276
      %v334 = vunpack.c.l.b16 %v277
      %v335 = vunpack.c.h.b16 %v277
      %v336 = vunpack.c.l.b16 %v278
      %v337 = vunpack.c.h.b16 %v278
      %v338 = vunpack.c.l.b16 %v279
      %v339 = vunpack.c.h.b16 %v279
      %v340 = vunpack.c.l.b16 %v280
      %v341 = vunpack.c.h.b16 %v280
      %v342 = vunpack.c.l.b16 %v281
      %v343 = vunpack.c.h.b16 %v281
      %v344 = vunpack.c.l.b16 %v282
      %v345 = vunpack.c.h.b16 %v282
      %v346 = vunpack.c.l.b16 %v283
      %v347 = vunpack.c.h.b16 %v283
      %v348 = vunpack.c.l.b16 %v284
      %v349 = vunpack.c.h.b16 %v284
      %v350 = vunpack.c.l.b16 %v285
      %v351 = vunpack.c.h.b16 %v285
      %v352 = vunpack.c.l.b16 %v286
      %v353 = vunpack.c.h.b16 %v286
      %v354 = vunpack.c.l.b16 %v287
      %v355 = vunpack.c.h.b16 %v287
      %v356 = vunpack.c.l.b16 %v288
      %v357 = vunpack.c.h.b16 %v288
      %v358 = vunpack.c.l.b16 %v289
      %v359 = vunpack.c.h.b16 %v289
      %v360 = vunpack.c.l.b16 %v290
      %v361 = vunpack.c.h.b16 %v290
      %v362 = vunpack.c.l.b16 %v291
      %v363 = vunpack.c.h.b16 %v291
      %v364 = vunpack.c.l.b16 %v292
      %v365 = vunpack.c.h.b16 %v292
      %v366 = vunpack.c.l.b16 %v293
      %v367 = vunpack.c.h.b16 %v293
      %v368 = vunpack.c.l.b16 %v294
      %v369 = vunpack.c.h.b16 %v294
      %v370 = vunpack.c.l.b16 %v295
      %v371 = vunpack.c.h.b16 %v295
      %v372 = vunpack.c.l.b16 %v296
      %v373 = vunpack.c.h.b16 %v296
      %v374 = vunpack.c.l.b16 %v297
      %v375 = vunpack.c.h.b16 %v297
      %v376 = vunpack.c.l.b16 %v298
      %v377 = vunpack.c.h.b16 %v298
      %v378 = vunpack.c.l.b16 %v299
      %v379 = vunpack.c.h.b16 %v299
      %v380 = vunpack.c.l.b16 %v300
      %v381 = vunpack.c.h.b16 %v300
      %v382 = vunpack.c.l.b16 %v301
      %v383 = vunpack.c.h.b16 %v301
      %v384 = vunpack.c.l.b16 %v302
      %v385 = vunpack.c.h.b16 %v302
      %v386 = vunpack.c.l.b16 %v303
      %v387 = vunpack.c.h.b16 %v303
      %v388 = vpack.c.b16 %v336, %v332
      %v389 = vpack.c.b16 %v337, %v333
      %v390 = vpack.c.b16 %v338, %v334
      %v391 = vpack.c.b16 %v339, %v335
      %v392 = vpack.c.b16 %v344, %v340
      %v393 = vpack.c.b16 %v345, %v341
      %v394 = vpack.c.b16 %v346, %v342
      %v395 = vpack.c.b16 %v347, %v343
      %v396 = vpack.c.b16 %v352, %v348
      %v397 = vpack.c.b16 %v353, %v349
      %v398 = vpack.c.b16 %v354, %v350
      %v399 = vpack.c.b16 %v355, %v351
      %v400 = vpack.c.b16 %v360, %v356
      %v401 = vpack.c.b16 %v361, %v357
      %v402 = vpack.c.b16 %v362, %v358
      %v403 = vpack.c.b16 %v363, %v359
      %v404 = vpack.c.b16 %v368, %v364
      %v405 = vpack.c.b16 %v369, %v365
      %v406 = vpack.c.b16 %v370, %v366
      %v407 = vpack.c.b16 %v371, %v367
      %v408 = vpack.c.b16 %v376, %v372
      %v409 = vpack.c.b16 %v377, %v373
      %v410 = vpack.c.b16 %v378, %v374
      %v411 = vpack.c.b16 %v379, %v375
      %v412 = vpack.c.b16 %v384, %v380
      %v413 = vpack.c.b16 %v385, %v381
      %v414 = vpack.c.b16 %v386, %v382
      %v415 = vpack.c.b16 %v387, %v383
      %vm440 = vcmask 883712
      %v442 = vsel %vm440, %v275, 0
      %vm444 = vcmask 1045504
      %v446 = vsel %vm444, %v412, 0
      %v449 = vsel %vm444, %v413, 0
      %v452 = vsel %vm444, %v414, 0
      %v455 = vsel %vm444, %v415, 0
      %457 = vmatprep.subr.bf16.mxu0 0
      %458 = vmatpush1.bf16.msra.mxu0 0
      %459 = vmatprep.subr.bf16.mxu0 %v449
      %460 = vmatpush1.bf16.msra.mxu0 %v446
      %461 = vmatprep.subr.bf16.mxu0 %v409
      %462 = vmatpush1.bf16.msra.mxu0 %v408
      %463 = vmatprep.subr.bf16.mxu0 %v405
      %464 = vmatpush1.bf16.msra.mxu0 %v404
      %465 = vmatprep.subr.bf16.mxu0 %v401
      %466 = vmatpush1.bf16.msra.mxu0 %v400
      %467 = vmatprep.subr.bf16.mxu0 %v397
      %468 = vmatpush1.bf16.msra.mxu0 %v396
      %469 = vmatprep.subr.bf16.mxu0 %v393
      %470 = vmatpush1.bf16.msra.mxu0 %v392
      %471 = vmatprep.subr.bf16.mxu0 %v389
      %472 = vmatpush1.bf16.msra.mxu0 %v388
      %473 = vmatprep.subr.bf16.mxu0 0
      %474 = vmatpush2.bf16.msra.mxu0 0
      %475 = vmatprep.subr.bf16.mxu0 0
      %476 = vmatpush2.bf16.msra.mxu0 0
      %477 = vmatprep.subr.bf16.mxu0 0
      %478 = vmatpush2.bf16.msra.mxu0 0
      %479 = vmatprep.subr.bf16.mxu0 0
      %480 = vmatpush2.bf16.msra.mxu0 0
      %481 = vmatprep.subr.bf16.mxu0 0
      %482 = vmatpush2.bf16.msra.mxu0 0
      %483 = vmatprep.subr.bf16.mxu0 0
      %484 = vmatpush2.bf16.msra.mxu0 0
      %485 = vmatprep.subr.bf16.mxu0 0
      %486 = vmatpush2.bf16.msra.mxu0 0
      %487 = vmatprep.subr.bf16.mxu0 0
      %488 = vmatpush2.bf16.msra.mxu0 0
      %489 = vmatprep.mubr.bf16.mxu0 0
      %490 = vmatmul.mubr.bf16.gmra.mxu0 %v442
      %v491 = vpop.f32.mrf.mxu0
      %v492 = vadd.f32 0.0, %v491
      %v493 = vpop.f32.mrf.mxu0
      %v494 = vadd.f32 0.0, %v493
      %v495 = vpop.f32.mrf.mxu0
      %v496 = vpop.f32.mrf.mxu0
      %497 = vdwg.mxu0
      %498 = vmatprep.subr.bf16.mxu0 0
      %499 = vmatpush1.bf16.msra.mxu0 0
      %500 = vmatprep.subr.bf16.mxu0 %v455
      %501 = vmatpush1.bf16.msra.mxu0 %v452
      %502 = vmatprep.subr.bf16.mxu0 %v411
      %503 = vmatpush1.bf16.msra.mxu0 %v410
      %504 = vmatprep.subr.bf16.mxu0 %v407
      %505 = vmatpush1.bf16.msra.mxu0 %v406
      %506 = vmatprep.subr.bf16.mxu0 %v403
      %507 = vmatpush1.bf16.msra.mxu0 %v402
      %508 = vmatprep.subr.bf16.mxu0 %v399
      %509 = vmatpush1.bf16.msra.mxu0 %v398
      %510 = vmatprep.subr.bf16.mxu0 %v395
      %511 = vmatpush1.bf16.msra.mxu0 %v394
      %512 = vmatprep.subr.bf16.mxu0 %v391
      %513 = vmatpush1.bf16.msra.mxu0 %v390
      %514 = vmatprep.subr.bf16.mxu0 0
      %515 = vmatpush2.bf16.msra.mxu0 0
      %516 = vmatprep.subr.bf16.mxu0 0
      %517 = vmatpush2.bf16.msra.mxu0 0
      %518 = vmatprep.subr.bf16.mxu0 0
      %519 = vmatpush2.bf16.msra.mxu0 0
      %520 = vmatprep.subr.bf16.mxu0 0
      %521 = vmatpush2.bf16.msra.mxu0 0
      %522 = vmatprep.subr.bf16.mxu0 0
      %523 = vmatpush2.bf16.msra.mxu0 0
      %524 = vmatprep.subr.bf16.mxu0 0
      %525 = vmatpush2.bf16.msra.mxu0 0
      %526 = vmatprep.subr.bf16.mxu0 0
      %527 = vmatpush2.bf16.msra.mxu0 0
      %528 = vmatprep.subr.bf16.mxu0 0
      %529 = vmatpush2.bf16.msra.mxu0 0
      %530 = vmatprep.mubr.bf16.mxu0 0
      %531 = vmatmul.mubr.bf16.gmra.mxu0 %v442
      %v532 = vpop.f32.mrf.mxu0
      %v533 = vadd.f32 0.0, %v532
      %v534 = vpop.f32.mrf.mxu0
      %v535 = vadd.f32 0.0, %v534
      %v536 = vpop.f32.mrf.mxu0
      %v537 = vpop.f32.mrf.mxu0
      %538 = vdwg.mxu0
      %539 = vst [vmem:[%s258] sm:$0xff] %v492
      %540 = vst [vmem:[%s258 + $0x8] sm:$0xff] %v494
      %541 = vst [vmem:[%s258 + $0x10] sm:$0xff] %v533
      %542 = vst [vmem:[%s258 + $0x18] sm:$0xff] %v535
      %v543 = vadd.f32 %v492, %v494
      %v544 = vadd.f32 %v543, %v533
      %v545 = vadd.f32 %v544, %v535
      %546 = vadd.xlane.f32.xlu0 %v545
      %v547 = vpop.xlane.xlu0 %546
      %vm548 = vcmask 7168
      %549 = vst.msk [vmem:[%s266] sm:$0xff] %vm548, %v547
      %v550 = vmul.f32 %v492, %v492
      %v551 = vmul.f32 %v494, %v494
      %v552 = vmul.f32 %v533, %v533
      %v553 = vmul.f32 %v535, %v535
      %v554 = vadd.f32 %v550, %v551
      %v555 = vadd.f32 %v554, %v552
      %v556 = vadd.f32 %v555, %v553
      %557 = vadd.xlane.f32.xlu0 %v556
      %v558 = vpop.xlane.xlu0 %557
      %559 = vst.msk [vmem:[%s273] sm:$0xff] %vm548, %v558
      %s560 = smul.u32 4, %s21
      %p561 = scmp.lt.s32.totalorder %s20, 1
      %s562 = scalar_select %p561, %s20, 1
      %p563 = scmp.lt.s32.totalorder %s560, 3
      %s564 = scalar_select %p563, %s560, 3
      %s565 = smul.addr %s562, 4
      %s566 = sadd.s32 %s564, %s565
      %s567 = smul.addr %s566, 8
      %s568 = scalar_lea.vmem %s2, %s567
      %p569 = scmp.lt.s32.totalorder %s20, 1
      %s570 = scalar_select %p569, %s20, 1
      %p571 = scmp.lt.s32.totalorder %s21, 0
      %s572 = scalar_select %p571, %s21, 0
      %s573 = sadd.s32 %s572, %s570
      %s574 = smul.addr %s573, 8
      %s575 = scalar_lea.vmem %s3, %s574
      %p576 = scmp.lt.s32.totalorder %s20, 1
      %s577 = scalar_select %p576, %s20, 1
      %p578 = scmp.lt.s32.totalorder %s21, 0
      %s579 = scalar_select %p578, %s21, 0
      %s580 = sadd.s32 %s579, %s577
      %s581 = smul.addr %s580, 8
      %s582 = scalar_lea.vmem %s4, %s581
      // Predicated region
      $region29: #{conv_block_forward.2} parent=27 // pred_check
        %p583 = pneg %p97
      $region30: #{conv_block_forward.2} parent=27 // pred_check_branch
        %585 = sbr.rel (%p583) target = $region32
      $region31: #{conv_block_forward.2} parent=27 // pred_region
        %s586 = smul.u32 4, %s21
      $region32: #{conv_block_forward.2} parent=27 // pred_fallthru
        _
      // Predicated region
      $region33: #{conv_block_forward.2} parent=27 // pred_check
        %p587 = pneg %p125
      $region34: #{conv_block_forward.2} parent=27 // pred_check_branch
        %589 = sbr.rel (%p587) target = $region36
      $region35: #{conv_block_forward.2} parent=27 // pred_region
        _
      $region36: #{conv_block_forward.2} parent=27 // pred_fallthru
        _
      // Predicated region
      $region37: #{conv_block_forward.2} parent=27 // pred_check
        %p590 = pneg %p153
      $region38: #{conv_block_forward.2} parent=27 // pred_check_branch
        %592 = sbr.rel (%p590) target = $region40
      $region39: #{conv_block_forward.2} parent=27 // pred_region
        _
      $region40: #{conv_block_forward.2} parent=27 // pred_fallthru
        _
    $region28: #{conv_block_forward.2} parent=5 // pred_fallthru
      _
    %p593 = scmp.le.s32.totalorder 2, %s11
    // Predicated region
    $region41: #{conv_block_forward.2} parent=5 // pred_check
      %p594 = pneg %p593
    $region42: #{conv_block_forward.2} parent=5 // pred_check_branch
      %596 = sbr.rel (%p594) target = $region44
    $region43: #{conv_block_forward.2} parent=5 // pred_region
      %s597 = ssub.s32 %s11, 2
      // Predicated region
      $region45: #{conv_block_forward.2} parent=43 // pred_check
        %p598 = pneg %p103
      $region46: #{conv_block_forward.2} parent=43 // pred_check_branch
        %600 = sbr.rel (%p598) target = $region48
      $region47: #{conv_block_forward.2} parent=43 // pred_region
        %s601 = smul.u32 4, %s23
        %p602 = scmp.lt.s32.totalorder %s22, 1
        %s603 = scalar_select %p602, %s22, 1
        %p604 = scmp.lt.s32.totalorder %s601, 3
        %s605 = scalar_select %p604, %s601, 3
        %s606 = smul.addr %s603, 4
        %s607 = sadd.s32 %s605, %s606
        %s608 = smul.addr %s607, 8
        %s609 = scalar_lea.vmem %s2, %s608
      $region48: #{conv_block_forward.2} parent=43 // pred_fallthru
        _
      // Predicated region
      $region49: #{conv_block_forward.2} parent=43 // pred_check
        %p610 = pneg %p131
      $region50: #{conv_block_forward.2} parent=43 // pred_check_branch
        %612 = sbr.rel (%p610) target = $region52
      $region51: #{conv_block_forward.2} parent=43 // pred_region
        %p613 = scmp.lt.s32.totalorder %s22, 1
        %s614 = scalar_select %p613, %s22, 1
        %p615 = scmp.lt.s32.totalorder %s23, 0
        %s616 = scalar_select %p615, %s23, 0
        %s617 = sadd.s32 %s616, %s614
        %s618 = smul.addr %s617, 8
        %s619 = scalar_lea.vmem %s3, %s618
      $region52: #{conv_block_forward.2} parent=43 // pred_fallthru
        _
      // Predicated region
      $region53: #{conv_block_forward.2} parent=43 // pred_check
        %p620 = pneg %p159
      $region54: #{conv_block_forward.2} parent=43 // pred_check_branch
        %622 = sbr.rel (%p620) target = $region56
      $region55: #{conv_block_forward.2} parent=43 // pred_region
        %p623 = scmp.lt.s32.totalorder %s22, 1
        %s624 = scalar_select %p623, %s22, 1
        %p625 = scmp.lt.s32.totalorder %s23, 0
        %s626 = scalar_select %p625, %s23, 0
        %s627 = sadd.s32 %s626, %s624
        %s628 = smul.addr %s627, 8
        %s629 = scalar_lea.vmem %s4, %s628
      $region56: #{conv_block_forward.2} parent=43 // pred_fallthru
        _
    $region44: #{conv_block_forward.2} parent=5 // pred_fallthru
      _
  $region6: #{conv_block_forward.2} parent=0 // loop_footer
    %s15 = sadd.s32 1, %s11
  $region7: #{conv_block_forward.2} parent=0 // loop_footer_branch
    %10 = sbr.rel target = $region3
  $region8: #{conv_block_forward.2} parent=0 // loop_exit
    _

</llo_original>
